<compile_context>
chip_gen: v7x
topology: tpu7x:2x2x1
jax: 0.10.0
libtpu: 0.0.40
codegen_flags: <defaults>
</compile_context>

<pallas_src>
import jax
import jax.numpy as jnp
from jax.experimental import pallas as pl
from jax.experimental.pallas import tpu as pltpu


def _crelu_kernel(x_ref, o_ref):
    # x_ref: (B_blk, C, T)    o_ref: (B_blk, 2, C, T)  -- lane-dense tiles.
    # relu(cat(x, -x)) == cat(relu(x), relu(-x))  (holds for 0s and NaNs).
    x = x_ref[...]
    o_ref[:, 0, :, :] = jnp.maximum(x, 0).astype(o_ref.dtype)
    o_ref[:, 1, :, :] = jnp.maximum(-x, 0).astype(o_ref.dtype)


def _pick_tiles(n, c, hw, dbytes, target_in_block_bytes):
    """Pick (batch_block, spatial_tile) for a ~target_in_block_bytes input block.

    The spatial tile is either a multiple of 128 or the full HW extent, so the
    last block dim always satisfies the (8,128) layout rule.  Any leftover
    budget goes to blocking multiple batches per step so small-HW shapes still
    amortize the fixed per-grid-step overhead.
    """
    per_lane = c * dbytes                              # bytes per spatial col per batch
    t_cap = max(128, (target_in_block_bytes // max(per_lane, 1)) // 128 * 128)
    if hw <= t_cap:
        t = hw                                          # full extent -> always legal
    else:
        t = t_cap                                       # multiple of 128; ragged edge via cdiv
    b_blk = max(1, min(n, target_in_block_bytes // max(per_lane * t, 1)))
    return b_blk, t


def crelu_m(x, *, target_in_block_bytes=4 * 1024 * 1024):
    """CReLU over channel axis 1 for NCHW input x: relu(cat(x, -x, dim=1))."""
    n, c, h, w = x.shape
    hw = h * w
    dbytes = jnp.dtype(x.dtype).itemsize

    b_blk, t = _pick_tiles(n, c, hw, dbytes, target_in_block_bytes)

    # Lane-dense view: trailing dim H*W instead of W (free, contiguous).
    x2 = x.reshape(n, c, hw)

    # Spatial grid axis first so megacore sharding works even when n == 1.
    grid = (pl.cdiv(hw, t), pl.cdiv(n, b_blk))

    cost = pl.CostEstimate(
        flops=2 * n * c * hw,                        # negate + max per output elem
        transcendentals=0,
        bytes_accessed=3 * n * c * hw * dbytes,      # read x, write 2x-sized out
    )

    out = pl.pallas_call(
        _crelu_kernel,
        out_shape=jax.ShapeDtypeStruct((n, 2, c, hw), x.dtype),
        grid_spec=pltpu.PrefetchScalarGridSpec(
            num_scalar_prefetch=0,
            grid=grid,
            in_specs=[
                pl.BlockSpec((b_blk, c, t), lambda j, i: (i, 0, j)),
            ],
            out_specs=pl.BlockSpec((b_blk, 2, c, t), lambda j, i: (i, 0, 0, j)),
        ),
        compiler_params=pltpu.CompilerParams(
            # Both axes independent -> shard across TensorCores on v7x.
            dimension_semantics=("parallel", "parallel"),
            # ~24 MiB double-buffered footprint at the 4 MiB input budget:
            # explicit limit keeps v5e (16 MiB scoped default) happy and stays
            # well inside v7x's 64 MiB physical VMEM.
            vmem_limit_bytes=32 * 1024 * 1024,
        ),
        cost_estimate=cost,
    )(x2)

    # (n, 2, c, hw) -> (n, 2c, h, w): contiguous reshape == channel concat.
    return out.reshape(n, 2 * c, h, w)


def crelu_ref(x):
    # Pure-JAX reference matching the PyTorch semantics exactly.
    return jnp.maximum(jnp.concatenate((x, -x), axis=1), 0)


if __name__ == "__main__":
    key = jax.random.PRNGKey(0)
    # Small NCHW input consistent with the module's forward: (N, C, H, W)
    x = jax.random.normal(key, (2, 4, 16, 16), dtype=jnp.float32)

    out = crelu_m(x)
    out = jax.block_until_ready(out)

    ref = crelu_ref(x)
    assert out.shape == (2, 8, 16, 16), out.shape
    assert out.dtype == x.dtype, out.dtype
    assert jnp.allclose(out, ref), "mismatch vs reference"

    print("KERNEL_OK")
</pallas_src>

<mosaic_0001>
module attributes {stable_mosaic.version = 11 : i64} {
  func.func @_crelu_kernel(%arg0: i32, %arg1: i32, %arg2: memref<2x4x256xf32, #tpu.memory_space<vmem>>, %arg3: memref<2x2x4x256xf32, #tpu.memory_space<vmem>>) attributes {dimension_semantics = [#tpu.dimension_semantics<parallel>, #tpu.dimension_semantics<parallel>], iteration_bounds = array<i64: 1, 1>, scalar_prefetch = 0 : i64, scratch_operands = 0 : i64, tpu.core_type = #tpu.core_type<tc>, window_params = [{transform_indices = @transform_0, window_bounds = array<i64: 2, 4, 256>}, {transform_indices = @transform_1, window_bounds = array<i64: 2, 2, 4, 256>}]} {
    %c0 = arith.constant 0 : index
    %c0_0 = arith.constant 0 : index
    %c0_1 = arith.constant 0 : index
    %0 = vector.load %arg2[%c0, %c0_0, %c0_1] : memref<2x4x256xf32, #tpu.memory_space<vmem>>, vector<2x4x256xf32>
    %cst = arith.constant 0.000000e+00 : f32
    %1 = vector.broadcast %cst : f32 to vector<2x4x256xf32>
    %2 = arith.maximumf %0, %1 : vector<2x4x256xf32>
    %c0_2 = arith.constant 0 : index
    %c0_3 = arith.constant 0 : index
    %c0_4 = arith.constant 0 : index
    %c0_5 = arith.constant 0 : index
    %3 = vector.load %arg3[%c0_2, %c0_3, %c0_4, %c0_5] : memref<2x2x4x256xf32, #tpu.memory_space<vmem>>, vector<2x1x4x256xf32>
    %4 = vector.shape_cast %3 : vector<2x1x4x256xf32> to vector<2x4x256xf32>
    %5 = vector.shape_cast %2 : vector<2x4x256xf32> to vector<2x1x4x256xf32>
    tpu.vector_store %arg3[%c0_2, %c0_3, %c0_4, %c0_5], %5 {strides = array<i32>} : memref<2x2x4x256xf32, #tpu.memory_space<vmem>>, vector<2x1x4x256xf32>,
    %cst_6 = arith.constant 0.000000e+00 : f32
    %6 = vector.broadcast %cst_6 : f32 to vector<2x4x256xf32>
    %7 = arith.subf %6, %0 : vector<2x4x256xf32>
    %cst_7 = arith.constant 0.000000e+00 : f32
    %8 = vector.broadcast %cst_7 : f32 to vector<2x4x256xf32>
    %9 = arith.maximumf %7, %8 : vector<2x4x256xf32>
    %c0_8 = arith.constant 0 : index
    %c1 = arith.constant 1 : index
    %c0_9 = arith.constant 0 : index
    %c0_10 = arith.constant 0 : index
    %10 = vector.load %arg3[%c0_8, %c1, %c0_9, %c0_10] : memref<2x2x4x256xf32, #tpu.memory_space<vmem>>, vector<2x1x4x256xf32>
    %11 = vector.shape_cast %10 : vector<2x1x4x256xf32> to vector<2x4x256xf32>
    %12 = vector.shape_cast %9 : vector<2x4x256xf32> to vector<2x1x4x256xf32>
    tpu.vector_store %arg3[%c0_8, %c1, %c0_9, %c0_10], %12 {strides = array<i32>} : memref<2x2x4x256xf32, #tpu.memory_space<vmem>>, vector<2x1x4x256xf32>,
    return
  }
  func.func @transform_0(%arg0: i32, %arg1: i32) -> (i32, i32, i32) {
    %c0_i32 = arith.constant 0 : i32
    %c0_i32_0 = arith.constant 0 : i32
    return %arg1, %c0_i32, %arg0 : i32, i32, i32
  }
  func.func @transform_1(%arg0: i32, %arg1: i32) -> (i32, i32, i32, i32) {
    %c0_i32 = arith.constant 0 : i32
    %c0_i32_0 = arith.constant 0 : i32
    %c0_i32_1 = arith.constant 0 : i32
    return %arg1, %c0_i32, %c0_i32_0, %arg0 : i32, i32, i32, i32
  }
}

</mosaic_0001>

<llo_original>
// kernel: tpu_custom_call.1
$region0: #{tpu_custom_call.1}
  #allocation0 [shape = 'u32[]', space=smem, size = 0x4, offset = 0x4, fixed_abs, tag = 'smem constant byte address 0x4 - core index']
  #allocation1 [shape = 'u32[144,128]{1,0:T(1,128)}', space=vmem, size = 0x12000, scoped, tag = 'internal scratch']
  %s0 = inlined_call_operand.hbm [shape: f32[2,4,256], index: 0, kind: input, shape index: {}]
  %s1 = inlined_call_operand.hbm [shape: f32[2,2,4,256], index: 1, kind: output, shape index: {}]
  %s2 = sld [smem:[#allocation0]]
  $region18: #{tpu_custom_call.1} parent=0
    _
  %s4 = ssub.s32 1, %s2
  %s5 = scalar_select 0, %s4, %s2
  $region1: #{tpu_custom_call.1} parent=0
    #allocation2 [shape = 'u8[8192]{0}', space=vmem, size = 0x2000, scoped, tag = 'input window, operand 0, single buffered']
    #allocation3 [shape = 's32[1]{0}', space=sflag, size = 0x4, scoped, tag = 'scoped memory for tpu_custom_call.1']
    #allocation4 [shape = 's32[1]{0}', space=sflag, size = 0x4, scoped, tag = 'scoped memory for tpu_custom_call.1']
    #allocation5 [shape = 'u8[16384]{0}', space=vmem, size = 0x4000, scoped, tag = 'output window, operand 0, single buffered']
    %6 = vsyncpa [#allocation3], 0
    %7 = vsyncpa [#allocation4], 0
    // Predicated region
    $region2: #{tpu_custom_call.1} parent=1 // pred_check
      _
    $region3: #{tpu_custom_call.1} parent=1 // pred_check_branch
      %9 = sbr.rel (0) target = $region5
    $region4: #{tpu_custom_call.1} parent=1 // pred_region
      %s11 = ssub.s32 256, 256
      %12 = vsyncadd [#allocation3], %s11
      %s13 = sshll.u32 [#allocation2], 4
      %s14 = int_to_ptr.vmem [resolvable:$true] %s13
      %19 = dma.hbm_to_vmem [thread:$0]  %s0, 256, %s14, [#allocation3], 128, 128, 8
    $region5: #{tpu_custom_call.1} parent=1 // pred_fallthru
      _
    // Predicated region
    $region6: #{tpu_custom_call.1} parent=1 // pred_check
      _
    $region7: #{tpu_custom_call.1} parent=1 // pred_check_branch
      %21 = sbr.rel (0) target = $region9
    $region8: #{tpu_custom_call.1} parent=1 // pred_region
      %22 = dma.done [#allocation3], 256
    $region9: #{tpu_custom_call.1} parent=1 // pred_fallthru
      _
    %v23 = vld [vmem:[#allocation2] sm:$0xff]
    %v24 = vld [vmem:[#allocation2 + $0x8] sm:$0xff]
    %v25 = vmax.f32 %v23, 0.0
    %v26 = vmax.f32 %v24, 0.0
    %27 = vst [vmem:[#allocation5] sm:$0xff] %v25
    %28 = vst [vmem:[#allocation5 + $0x10] sm:$0xff] %v26
    %v29 = vsub.f32 0.0, %v23
    %v30 = vsub.f32 0.0, %v24
    %v31 = vmax.f32 %v29, 0.0
    %v32 = vmax.f32 %v30, 0.0
    %s33 = scalar_lea.vmem [#allocation5], 8
    %34 = vst [vmem:[%s33] sm:$0xff] %v31
    %35 = vst [vmem:[%s33 + $0x10] sm:$0xff] %v32
    // Predicated region
    $region10: #{tpu_custom_call.1} parent=1 // pred_check
      _
    $region11: #{tpu_custom_call.1} parent=1 // pred_check_branch
      %37 = sbr.rel (0) target = $region13
    $region12: #{tpu_custom_call.1} parent=1 // pred_region
      %s39 = ssub.s32 512, 512
      %40 = vsyncadd [#allocation4], %s39
      %s41 = sshll.u32 [#allocation5], 4
      %s42 = int_to_ptr.vmem [resolvable:$true] %s41
      %47 = dma.vmem_to_hbm [thread:$0]  %s42, 512, %s1, [#allocation4], 128, 128, 8
    $region13: #{tpu_custom_call.1} parent=1 // pred_fallthru
      _
    // Predicated region
    $region14: #{tpu_custom_call.1} parent=1 // pred_check
      _
    $region15: #{tpu_custom_call.1} parent=1 // pred_check_branch
      %49 = sbr.rel (0) target = $region17
    $region16: #{tpu_custom_call.1} parent=1 // pred_region
      %50 = dma.done [#allocation4], 512
    $region17: #{tpu_custom_call.1} parent=1 // pred_fallthru
      _
    %51 = vsyncpa [#allocation3], 1
    %52 = vsyncpa [#allocation4], 1

</llo_original>
